<compile_context>
chip_gen: v7x
topology: tpu7x:2x2x1
jax: 0.10.0
libtpu: 0.0.40
codegen_flags: <defaults>
</compile_context>

<pallas_src>
import jax
import jax.numpy as jnp
from jax.experimental import pallas as pl
from jax.experimental.pallas import tpu as pltpu
from functools import partial


def _gelu_tanh(x):
    # GELU with tanh approximation, matching nn.GELU(approximate='tanh')
    c = 0.7978845608028654  # sqrt(2/pi)
    return 0.5 * x * (1.0 + jnp.tanh(c * (x + 0.044715 * x * x * x)))


def mlp_kernel(x_ref, w1_ref, w2_ref, o_ref, acc_ref):
    # x_ref  : (tm, C)  bf16  -- same block for every k (reused across H tiles)
    # w1_ref : (C, th)  bf16  -- k-th column slab of W1
    # w2_ref : (th, C)  bf16  -- k-th row slab of W2
    # o_ref  : (tm, C)  bf16  -- same block for every k (resident output)
    # acc_ref: (tm, C)  f32   -- accumulator scratch
    k = pl.program_id(1)

    @pl.when(k == 0)
    def _():
        acc_ref[...] = jnp.zeros_like(acc_ref)

    # c_fc slab: (tm, C) @ (C, th) -> (tm, th), f32 accumulate on the MXU
    h = jnp.dot(x_ref[...], w1_ref[...], preferred_element_type=jnp.float32)
    # GELU(tanh) on the freshly produced (tm, th) chunk (VPU/EUP)
    h = _gelu_tanh(h)
    # partial c_proj: (tm, th) @ (th, C) accumulated into the f32 scratch
    acc_ref[...] += jnp.dot(h.astype(w2_ref.dtype), w2_ref[...],
                            preferred_element_type=jnp.float32)

    @pl.when(k == pl.num_programs(1) - 1)
    def _():
        o_ref[...] = acc_ref[...].astype(o_ref.dtype)


def _pick_hidden_tile(H, target, align=128):
    """Largest tile <= target that is a multiple of `align` and divides H
    exactly (padding on the reduction axis would corrupt the accumulation)."""
    if H <= target:
        return H
    t = (target // align) * align
    while t >= align:
        if H % t == 0:
            return t
        t -= align
    return H  # fallback: keep the full hidden dim resident


@partial(jax.jit, static_argnames=("block_m", "block_h"))
def mlp_forward(x, w1, w2, block_m=256, block_h=512):
    """x: (B, T, C) bf16; w1: (C, 4C); w2: (4C, C). Returns (B, T, C) bf16."""
    B, T, C = x.shape
    H = w1.shape[1]
    M = B * T
    x2d = x.reshape(M, C)

    # M tiles: large to fill MXU rows; a partial last tile is fine (its padded
    # rows are never written back). Shrink to full M for tiny inputs.
    tm = M if M <= block_m else block_m
    # H tiles: must divide H exactly since H is the reduction axis of c_proj.
    th = _pick_hidden_tile(H, block_h)

    grid = (pl.cdiv(M, tm), H // th)

    itemsize = jnp.dtype(x.dtype).itemsize
    cost = pl.CostEstimate(
        flops=4 * M * C * H,                    # two matmuls: 2*M*C*H each
        transcendentals=M * H,                  # one tanh per hidden element
        bytes_accessed=(M * C + C * H + H * C + M * C) * itemsize,
    )

    out2d = pl.pallas_call(
        mlp_kernel,
        out_shape=jax.ShapeDtypeStruct((M, C), x.dtype),
        grid_spec=pltpu.PrefetchScalarGridSpec(
            num_scalar_prefetch=0,
            grid=grid,
            in_specs=[
                pl.BlockSpec((tm, C), lambda i, k: (i, 0)),   # x tile
                pl.BlockSpec((C, th), lambda i, k: (0, k)),   # W1 column slab
                pl.BlockSpec((th, C), lambda i, k: (k, 0)),   # W2 row slab
            ],
            out_specs=pl.BlockSpec((tm, C), lambda i, k: (i, 0)),
            scratch_shapes=[pltpu.VMEM((tm, C), jnp.float32)],
        ),
        compiler_params=pltpu.CompilerParams(
            dimension_semantics=("parallel", "arbitrary"),
            vmem_limit_bytes=64 * 1024 * 1024,
        ),
        cost_estimate=cost,
    )(x2d, w1, w2)

    return out2d.reshape(B, T, C)


def reference_mlp(x, w1, w2):
    # Pure-JAX reference of the same math (f32 accumulate).
    h = jnp.dot(x.astype(jnp.float32), w1.astype(jnp.float32))
    h = _gelu_tanh(h)
    y = jnp.dot(h, w2.astype(jnp.float32))
    return y.astype(x.dtype)


if __name__ == "__main__":
    # Small config consistent with the module: n_embd=32 -> hidden=128.
    B, T, C = 2, 8, 32
    H = 4 * C

    key = jax.random.PRNGKey(0)
    kx, k1, k2 = jax.random.split(key, 3)

    # Deterministic synthetic params: scaled normals, bf16 like Linear.dtype.
    x = jax.random.normal(kx, (B, T, C), dtype=jnp.float32).astype(jnp.bfloat16)
    # PyTorch stores weight as (out, in); we keep the (in, out) transpose.
    w1 = (0.02 * jax.random.normal(k1, (C, H), dtype=jnp.float32)).astype(jnp.bfloat16)
    w2 = (0.02 * jax.random.normal(k2, (H, C), dtype=jnp.float32)).astype(jnp.bfloat16)

    y = mlp_forward(x, w1, w2)
    y = jax.block_until_ready(y)

    # Sanity check against pure-JAX reference.
    y_ref = reference_mlp(x, w1, w2)
    err = jnp.max(jnp.abs(y.astype(jnp.float32) - y_ref.astype(jnp.float32)))
    assert err < 1e-2, f"mismatch vs reference: {err}"

    print("KERNEL_OK")
</pallas_src>

<mosaic_0001>
module attributes {stable_mosaic.version = 11 : i64} {
  func.func @mlp_kernel(%arg0: i32, %arg1: i32, %arg2: memref<16x32xbf16, #tpu.memory_space<vmem>>, %arg3: memref<32x128xbf16, #tpu.memory_space<vmem>>, %arg4: memref<128x32xbf16, #tpu.memory_space<vmem>>, %arg5: memref<16x32xbf16, #tpu.memory_space<vmem>>, %arg6: memref<16x32xf32, #tpu.memory_space<vmem>>) attributes {dimension_semantics = [#tpu.dimension_semantics<parallel>, #tpu.dimension_semantics<arbitrary>], iteration_bounds = array<i64: 1, 1>, scalar_prefetch = 0 : i64, scratch_operands = 1 : i64, tpu.core_type = #tpu.core_type<tc>, window_params = [{transform_indices = @transform_0, window_bounds = array<i64: 16, 32>}, {transform_indices = @transform_1, window_bounds = array<i64: 32, 128>}, {transform_indices = @transform_2, window_bounds = array<i64: 128, 32>}, {transform_indices = @transform_3, window_bounds = array<i64: 16, 32>}]} {
    %c0_i32 = arith.constant 0 : i32
    %0 = arith.cmpi eq, %arg1, %c0_i32 : i32
    %1 = arith.extui %0 : i1 to i32
    %c0_i32_0 = arith.constant 0 : i32
    %2 = arith.cmpi ne, %1, %c0_i32_0 : i32
    scf.if %2 {
      %cst_17 = arith.constant 0.000000e+00 : f32
      %28 = vector.broadcast %cst_17 : f32 to vector<16x32xf32>
      %c0_18 = arith.constant 0 : index
      %c0_19 = arith.constant 0 : index
      %29 = vector.load %arg6[%c0_18, %c0_19] : memref<16x32xf32, #tpu.memory_space<vmem>>, vector<16x32xf32>
      tpu.vector_store %arg6[%c0_18, %c0_19], %28 {strides = array<i32>} : memref<16x32xf32, #tpu.memory_space<vmem>>, vector<16x32xf32>,
    } else {
    }
    %c0 = arith.constant 0 : index
    %c0_1 = arith.constant 0 : index
    %3 = vector.load %arg2[%c0, %c0_1] : memref<16x32xbf16, #tpu.memory_space<vmem>>, vector<16x32xbf16>
    %c0_2 = arith.constant 0 : index
    %c0_3 = arith.constant 0 : index
    %4 = vector.load %arg3[%c0_2, %c0_3] : memref<32x128xbf16, #tpu.memory_space<vmem>>, vector<32x128xbf16>
    %cst = arith.constant dense<0.000000e+00> : vector<16x128xf32>
    %5 = tpu.matmul %3, %4, %cst {dimension_numbers = #tpu.dot_dimension_numbers<[1], [0], [0], [1], [0, 0, 1, 1], [], []>} : vector<16x32xbf16>, vector<32x128xbf16>, vector<16x128xf32> -> vector<16x128xf32>
    %cst_4 = arith.constant 5.000000e-01 : f32
    %6 = vector.broadcast %cst_4 : f32 to vector<16x128xf32>
    %7 = arith.mulf %6, %5 : vector<16x128xf32>
    %cst_5 = arith.constant 4.471500e-02 : f32
    %8 = vector.broadcast %cst_5 : f32 to vector<16x128xf32>
    %9 = arith.mulf %8, %5 : vector<16x128xf32>
    %10 = arith.mulf %9, %5 : vector<16x128xf32>
    %11 = arith.mulf %10, %5 : vector<16x128xf32>
    %12 = arith.addf %5, %11 : vector<16x128xf32>
    %cst_6 = arith.constant 0.797884583 : f32
    %13 = vector.broadcast %cst_6 : f32 to vector<16x128xf32>
    %14 = arith.mulf %13, %12 : vector<16x128xf32>
    %15 = math.tanh %14 : vector<16x128xf32>
    %cst_7 = arith.constant 1.000000e+00 : f32
    %16 = vector.broadcast %cst_7 : f32 to vector<16x128xf32>
    %17 = arith.addf %16, %15 : vector<16x128xf32>
    %18 = arith.mulf %7, %17 : vector<16x128xf32>
    %c0_8 = arith.constant 0 : index
    %c0_9 = arith.constant 0 : index
    %19 = vector.load %arg6[%c0_8, %c0_9] : memref<16x32xf32, #tpu.memory_space<vmem>>, vector<16x32xf32>
    %20 = arith.truncf %18 : vector<16x128xf32> to vector<16x128xbf16>
    %c0_10 = arith.constant 0 : index
    %c0_11 = arith.constant 0 : index
    %21 = vector.load %arg4[%c0_10, %c0_11] : memref<128x32xbf16, #tpu.memory_space<vmem>>, vector<128x32xbf16>
    %cst_12 = arith.constant dense<0.000000e+00> : vector<16x32xf32>
    %22 = tpu.matmul %20, %21, %cst_12 {dimension_numbers = #tpu.dot_dimension_numbers<[1], [0], [0], [1], [0, 0, 1, 1], [], []>} : vector<16x128xbf16>, vector<128x32xbf16>, vector<16x32xf32> -> vector<16x32xf32>
    %23 = arith.addf %19, %22 : vector<16x32xf32>
    %c0_13 = arith.constant 0 : index
    %c0_14 = arith.constant 0 : index
    %24 = vector.load %arg6[%c0_13, %c0_14] : memref<16x32xf32, #tpu.memory_space<vmem>>, vector<16x32xf32>
    tpu.vector_store %arg6[%c0_13, %c0_14], %23 {strides = array<i32>} : memref<16x32xf32, #tpu.memory_space<vmem>>, vector<16x32xf32>,
    %c0_i32_15 = arith.constant 0 : i32
    %25 = arith.cmpi eq, %arg1, %c0_i32_15 : i32
    %26 = arith.extui %25 : i1 to i32
    %c0_i32_16 = arith.constant 0 : i32
    %27 = arith.cmpi ne, %26, %c0_i32_16 : i32
    scf.if %27 {
      %c0_17 = arith.constant 0 : index
      %c0_18 = arith.constant 0 : index
      %28 = vector.load %arg6[%c0_17, %c0_18] : memref<16x32xf32, #tpu.memory_space<vmem>>, vector<16x32xf32>
      %29 = arith.truncf %28 : vector<16x32xf32> to vector<16x32xbf16>
      %c0_19 = arith.constant 0 : index
      %c0_20 = arith.constant 0 : index
      %30 = vector.load %arg5[%c0_19, %c0_20] : memref<16x32xbf16, #tpu.memory_space<vmem>>, vector<16x32xbf16>
      tpu.vector_store %arg5[%c0_19, %c0_20], %29 {strides = array<i32>} : memref<16x32xbf16, #tpu.memory_space<vmem>>, vector<16x32xbf16>,
    } else {
    }
    return
  }
  func.func @transform_0(%arg0: i32, %arg1: i32) -> (i32, i32) {
    %c0_i32 = arith.constant 0 : i32
    %c0_i32_0 = arith.constant 0 : i32
    return %arg0, %c0_i32 : i32, i32
  }
  func.func @transform_1(%arg0: i32, %arg1: i32) -> (i32, i32) {
    %c0_i32 = arith.constant 0 : i32
    %c0_i32_0 = arith.constant 0 : i32
    return %c0_i32, %arg1 : i32, i32
  }
  func.func @transform_2(%arg0: i32, %arg1: i32) -> (i32, i32) {
    %c0_i32 = arith.constant 0 : i32
    %c0_i32_0 = arith.constant 0 : i32
    return %arg1, %c0_i32 : i32, i32
  }
  func.func @transform_3(%arg0: i32, %arg1: i32) -> (i32, i32) {
    %c0_i32 = arith.constant 0 : i32
    %c0_i32_0 = arith.constant 0 : i32
    return %arg0, %c0_i32 : i32, i32
  }
}

</mosaic_0001>

<llo_original>
// kernel: mlp_forward.1
$region0: #{mlp_forward.1}
  #allocation0 [shape = 'u32[]', space=smem, size = 0x4, offset = 0x4, fixed_abs, tag = 'smem constant byte address 0x4 - core index']
  #allocation1 [shape = 'u32[144,128]{1,0:T(1,128)}', space=vmem, size = 0x12000, scoped, tag = 'internal scratch']
  #allocation2 [shape = 'f32[16,32]{1,0:T(8,128)}', space=vmem, size = 0x2000, scoped, tag = 'scratch operand']
  %s0 = inlined_call_operand.hbm [shape: bf16[16,32], index: 0, kind: input, shape index: {}]
  %s1 = inlined_call_operand.hbm [shape: bf16[32,128], index: 1, kind: input, shape index: {}]
  %s2 = inlined_call_operand.hbm [shape: bf16[128,32], index: 2, kind: input, shape index: {}]
  %s3 = inlined_call_operand.hbm [shape: bf16[16,32], index: 3, kind: output, shape index: {}]
  %s4 = sld [smem:[#allocation0]]
  $region42: #{mlp_forward.1} parent=0
    _
  %s6 = ssub.s32 1, %s4
  %s7 = scalar_select 0, %s6, %s4
  $region1: #{mlp_forward.1} parent=0
    #allocation3 [shape = 'u8[4096]{0}', space=vmem, size = 0x1000, scoped, tag = 'input window, operand 0, single buffered']
    #allocation4 [shape = 's32[1]{0}', space=sflag, size = 0x4, scoped, tag = 'scoped memory for mlp_forward.1']
    #allocation5 [shape = 's32[1]{0}', space=sflag, size = 0x4, scoped, tag = 'scoped memory for mlp_forward.1']
    #allocation6 [shape = 'u8[8192]{0}', space=vmem, size = 0x2000, scoped, tag = 'input window, operand 1, single buffered']
    #allocation7 [shape = 's32[1]{0}', space=sflag, size = 0x4, scoped, tag = 'scoped memory for mlp_forward.1']
    #allocation8 [shape = 'u8[32768]{0}', space=vmem, size = 0x8000, scoped, tag = 'input window, operand 2, single buffered']
    #allocation9 [shape = 'u8[4096]{0}', space=vmem, size = 0x1000, scoped, tag = 'output window, operand 0, single buffered']
    %8 = vsyncpa [#allocation4], 0
    %9 = vsyncpa [#allocation7], 0
    %10 = vsyncpa [#allocation5], 0
    // Predicated region
    $region2: #{mlp_forward.1} parent=1 // pred_check
      _
    $region3: #{mlp_forward.1} parent=1 // pred_check_branch
      %12 = sbr.rel (0) target = $region5
    $region4: #{mlp_forward.1} parent=1 // pred_region
      %s14 = ssub.s32 128, 128
      %15 = vsyncadd [#allocation4], %s14
      %s16 = sshll.u32 [#allocation3], 4
      %s17 = int_to_ptr.vmem [resolvable:$true] %s16
      %22 = dma.hbm_to_vmem [thread:$0]  %s0, 128, %s17, [#allocation4], 64, 64, 4
    $region5: #{mlp_forward.1} parent=1 // pred_fallthru
      _
    // Predicated region
    $region6: #{mlp_forward.1} parent=1 // pred_check
      _
    $region7: #{mlp_forward.1} parent=1 // pred_check_branch
      %24 = sbr.rel (0) target = $region9
    $region8: #{mlp_forward.1} parent=1 // pred_region
      %s26 = ssub.s32 256, 256
      %27 = vsyncadd [#allocation7], %s26
      %s28 = sshll.u32 [#allocation6], 4
      %s29 = int_to_ptr.vmem [resolvable:$true] %s28
      %34 = dma.hbm_to_vmem [thread:$0]  %s1, 256, %s29, [#allocation7], 64, 64, 4
    $region9: #{mlp_forward.1} parent=1 // pred_fallthru
      _
    // Predicated region
    $region10: #{mlp_forward.1} parent=1 // pred_check
      _
    $region11: #{mlp_forward.1} parent=1 // pred_check_branch
      %36 = sbr.rel (0) target = $region13
    $region12: #{mlp_forward.1} parent=1 // pred_region
      %s38 = ssub.s32 1024, 1024
      %39 = vsyncadd [#allocation7], %s38
      %s40 = sshll.u32 [#allocation8], 4
      %s41 = int_to_ptr.vmem [resolvable:$true] %s40
      %46 = dma.hbm_to_vmem [thread:$0]  %s2, 1024, %s41, [#allocation7], 64, 64, 4
    $region13: #{mlp_forward.1} parent=1 // pred_fallthru
      _
    // Predicated region
    $region14: #{mlp_forward.1} parent=1 // pred_check
      _
    $region15: #{mlp_forward.1} parent=1 // pred_check_branch
      %48 = sbr.rel (0) target = $region17
    $region16: #{mlp_forward.1} parent=1 // pred_region
      %49 = dma.done [#allocation4], 128
    $region17: #{mlp_forward.1} parent=1 // pred_fallthru
      _
    // Predicated region
    $region18: #{mlp_forward.1} parent=1 // pred_check
      _
    $region19: #{mlp_forward.1} parent=1 // pred_check_branch
      %51 = sbr.rel (0) target = $region21
    $region20: #{mlp_forward.1} parent=1 // pred_region
      %52 = dma.done [#allocation7], 256
    $region21: #{mlp_forward.1} parent=1 // pred_fallthru
      _
    // Predicated region
    $region22: #{mlp_forward.1} parent=1 // pred_check
      _
    $region23: #{mlp_forward.1} parent=1 // pred_check_branch
      %54 = sbr.rel (0) target = $region25
    $region24: #{mlp_forward.1} parent=1 // pred_region
      %55 = dma.done [#allocation7], 1024
    $region25: #{mlp_forward.1} parent=1 // pred_fallthru
      _
    %p57 = scmp.eq.s32.totalorder 0, 0
    // Predicated region
    $region26: #{mlp_forward.1} parent=1 // pred_check
      %p58 = pneg %p57
    $region27: #{mlp_forward.1} parent=1 // pred_check_branch
      %60 = sbr.rel (%p58) target = $region29
    $region28: #{mlp_forward.1} parent=1 // pred_region
      %vm61 = vcmask 261120
      %62 = vst.msk [vmem:[#allocation2] sm:$0xff] %vm61, 0.0
      %63 = vst.msk [vmem:[#allocation2 + $0x8] sm:$0xff] %vm61, 0.0
    $region29: #{mlp_forward.1} parent=1 // pred_fallthru
      _
    %v64 = vld [vmem:[#allocation3] sm:$0xf]
    %v65 = vld [vmem:[#allocation3 + $0x4] sm:$0xf]
    %v66 = vld [vmem:[#allocation6] sm:$0xf]
    %v67 = vld [vmem:[#allocation6 + $0x4] sm:$0xf]
    %v68 = vld [vmem:[#allocation6 + $0x8] sm:$0xf]
    %v69 = vld [vmem:[#allocation6 + $0xc] sm:$0xf]
    %v72 = vunpack.c.l.b16 %v64
    %v73 = vunpack.c.l.b16 %v65
    %v74 = vpack.c.b16 %v73, %v72
    %v79 = vunpack.c.l.b16 %v66
    %v80 = vunpack.c.l.b16 %v67
    %v81 = vunpack.c.l.b16 %v68
    %v82 = vunpack.c.l.b16 %v69
    %v83 = vpack.c.b16 %v80, %v79
    %v84 = vpack.c.b16 %v82, %v81
    %vm87 = vcmask 261120
    %v89 = vsel %vm87, %v74, 0
    %91 = vmatprep.subr.bf16.mxu0 0
    %92 = vmatpush1.bf16.msra.mxu0 %v83
    %93 = vmatprep.subr.bf16.mxu0 0
    %94 = vmatpush1.bf16.msra.mxu0 %v84
    %95 = vmatprep.subr.bf16.mxu0 0
    %96 = vmatpush1.bf16.msra.mxu0 0
    %97 = vmatprep.subr.bf16.mxu0 0
    %98 = vmatpush1.bf16.msra.mxu0 0
    %99 = vmatprep.subr.bf16.mxu0 0
    %100 = vmatpush1.bf16.msra.mxu0 0
    %101 = vmatprep.subr.bf16.mxu0 0
    %102 = vmatpush1.bf16.msra.mxu0 0
    %103 = vmatprep.subr.bf16.mxu0 0
    %104 = vmatpush1.bf16.msra.mxu0 0
    %105 = vmatprep.subr.bf16.mxu0 0
    %106 = vmatpush1.bf16.msra.mxu0 0
    %107 = vmatprep.subr.bf16.mxu0 0
    %108 = vmatpush1.bf16.msra.mxu0 0
    %109 = vmatprep.subr.bf16.mxu0 0
    %110 = vmatpush1.bf16.msra.mxu0 0
    %111 = vmatprep.subr.bf16.mxu0 0
    %112 = vmatpush1.bf16.msra.mxu0 0
    %113 = vmatprep.subr.bf16.mxu0 0
    %114 = vmatpush1.bf16.msra.mxu0 0
    %115 = vmatprep.subr.bf16.mxu0 0
    %116 = vmatpush1.bf16.msra.mxu0 0
    %117 = vmatprep.subr.bf16.mxu0 0
    %118 = vmatpush1.bf16.msra.mxu0 0
    %119 = vmatprep.subr.bf16.mxu0 0
    %120 = vmatpush1.bf16.msra.mxu0 0
    %121 = vmatprep.subr.bf16.mxu0 0
    %122 = vmatpush1.bf16.msra.mxu0 0
    %123 = vmatprep.mubr.bf16.mxu0 0
    %124 = vmatmul.mubr.bf16.gmra.mrb[0].mxu0 %v89
    %v125 = vpop.f32.mrb[0].mxu0
    %v126 = vadd.f32 0.0, %v125
    %v127 = vpop.f32.mrb[0].mxu0
    %v128 = vpop.f32.mrb[0].mxu0
    %v129 = vadd.f32 0.0, %v128
    %v130 = vpop.f32.mrb[0].mxu0
    %131 = vdwg.mxu0
    %v132 = vmul.f32 %v126, 0.5
    %v133 = vmul.f32 %v129, 0.5
    %v134 = vmul.f32 %v126, 0.044715
    %v135 = vmul.f32 %v129, 0.044715
    %v136 = vmul.f32 %v134, %v126
    %v137 = vmul.f32 %v135, %v129
    %v138 = vmul.f32 %v136, %v126
    %v139 = vmul.f32 %v137, %v129
    %v140 = vadd.f32 %v126, %v138
    %v141 = vadd.f32 %v129, %v139
    %v142 = vmul.f32 %v140, 0.7978846
    %v143 = vmul.f32 %v141, 0.7978846
    %v144 = vtanh.pop %v142
    %v145 = vtanh.pop %v143
    %v146 = vadd.f32 %v144, 1.0
    %v147 = vadd.f32 %v145, 1.0
    %v148 = vmul.f32 %v132, %v146
    %v149 = vmul.f32 %v133, %v147
    %v150 = vld [vmem:[#allocation2] sm:$0xff]
    %v151 = vld [vmem:[#allocation2 + $0x8] sm:$0xff]
    %v152 = vpack.c.bf16 %v149, %v148
    %v153 = vld [vmem:[#allocation8] sm:$0xf]
    %v154 = vld [vmem:[#allocation8 + $0x4] sm:$0xf]
    %v155 = vld [vmem:[#allocation8 + $0x8] sm:$0xf]
    %v156 = vld [vmem:[#allocation8 + $0xc] sm:$0xf]
    %v157 = vld [vmem:[#allocation8 + $0x10] sm:$0xf]
    %v158 = vld [vmem:[#allocation8 + $0x14] sm:$0xf]
    %v159 = vld [vmem:[#allocation8 + $0x18] sm:$0xf]
    %v160 = vld [vmem:[#allocation8 + $0x1c] sm:$0xf]
    %v161 = vld [vmem:[#allocation8 + $0x20] sm:$0xf]
    %v162 = vld [vmem:[#allocation8 + $0x24] sm:$0xf]
    %v163 = vld [vmem:[#allocation8 + $0x28] sm:$0xf]
    %v164 = vld [vmem:[#allocation8 + $0x2c] sm:$0xf]
    %v165 = vld [vmem:[#allocation8 + $0x30] sm:$0xf]
    %v166 = vld [vmem:[#allocation8 + $0x34] sm:$0xf]
    %v167 = vld [vmem:[#allocation8 + $0x38] sm:$0xf]
    %v168 = vld [vmem:[#allocation8 + $0x3c] sm:$0xf]
    %v185 = vunpack.c.l.b16 %v153
    %v186 = vunpack.c.l.b16 %v154
    %v187 = vunpack.c.l.b16 %v155
    %v188 = vunpack.c.l.b16 %v156
    %v189 = vunpack.c.l.b16 %v157
    %v190 = vunpack.c.l.b16 %v158
    %v191 = vunpack.c.l.b16 %v159
    %v192 = vunpack.c.l.b16 %v160
    %v193 = vunpack.c.l.b16 %v161
    %v194 = vunpack.c.l.b16 %v162
    %v195 = vunpack.c.l.b16 %v163
    %v196 = vunpack.c.l.b16 %v164
    %v197 = vunpack.c.l.b16 %v165
    %v198 = vunpack.c.l.b16 %v166
    %v199 = vunpack.c.l.b16 %v167
    %v200 = vunpack.c.l.b16 %v168
    %v201 = vpack.c.b16 %v186, %v185
    %v202 = vpack.c.b16 %v188, %v187
    %v203 = vpack.c.b16 %v190, %v189
    %v204 = vpack.c.b16 %v192, %v191
    %v205 = vpack.c.b16 %v194, %v193
    %v206 = vpack.c.b16 %v196, %v195
    %v207 = vpack.c.b16 %v198, %v197
    %v208 = vpack.c.b16 %v200, %v199
    %217 = vmatprep.subr.bf16.mxu0 0
    %218 = vmatpush1.bf16.msra.mxu0 %v201
    %219 = vmatprep.subr.bf16.mxu0 0
    %220 = vmatpush1.bf16.msra.mxu0 %v202
    %221 = vmatprep.subr.bf16.mxu0 0
    %222 = vmatpush1.bf16.msra.mxu0 %v203
    %223 = vmatprep.subr.bf16.mxu0 0
    %224 = vmatpush1.bf16.msra.mxu0 %v204
    %225 = vmatprep.subr.bf16.mxu0 0
    %226 = vmatpush1.bf16.msra.mxu0 %v205
    %227 = vmatprep.subr.bf16.mxu0 0
    %228 = vmatpush1.bf16.msra.mxu0 %v206
    %229 = vmatprep.subr.bf16.mxu0 0
    %230 = vmatpush1.bf16.msra.mxu0 %v207
    %231 = vmatprep.subr.bf16.mxu0 0
    %232 = vmatpush1.bf16.msra.mxu0 %v208
    %233 = vmatprep.subr.bf16.mxu0 0
    %234 = vmatpush1.bf16.msra.mxu0 0
    %235 = vmatprep.subr.bf16.mxu0 0
    %236 = vmatpush1.bf16.msra.mxu0 0
    %237 = vmatprep.subr.bf16.mxu0 0
    %238 = vmatpush1.bf16.msra.mxu0 0
    %239 = vmatprep.subr.bf16.mxu0 0
    %240 = vmatpush1.bf16.msra.mxu0 0
    %241 = vmatprep.subr.bf16.mxu0 0
    %242 = vmatpush1.bf16.msra.mxu0 0
    %243 = vmatprep.subr.bf16.mxu0 0
    %244 = vmatpush1.bf16.msra.mxu0 0
    %245 = vmatprep.subr.bf16.mxu0 0
    %246 = vmatpush1.bf16.msra.mxu0 0
    %247 = vmatprep.subr.bf16.mxu0 0
    %248 = vmatpush1.bf16.msra.mxu0 0
    %249 = vmatprep.mubr.bf16.mxu0 0
    %250 = vmatmul.mubr.bf16.gmra.mrb[0].mxu0 %v152
    %v251 = vpop.f32.mrb[0].mxu0
    %v252 = vadd.f32 0.0, %v251
    %v253 = vpop.f32.mrb[0].mxu0
    %v254 = vpop.f32.mrb[0].mxu0
    %v255 = vadd.f32 0.0, %v254
    %v256 = vpop.f32.mrb[0].mxu0
    %257 = vdwg.mxu0
    %v258 = vadd.f32 %v150, %v252
    %v259 = vadd.f32 %v151, %v255
    %260 = vst.msk [vmem:[#allocation2] sm:$0xff] %vm87, %v258
    %261 = vst.msk [vmem:[#allocation2 + $0x8] sm:$0xff] %vm87, %v259
    // Predicated region
    $region30: #{mlp_forward.1} parent=1 // pred_check
      %p262 = pneg %p57
    $region31: #{mlp_forward.1} parent=1 // pred_check_branch
      %264 = sbr.rel (%p262) target = $region33
    $region32: #{mlp_forward.1} parent=1 // pred_region
      %v265 = vld [vmem:[#allocation2] sm:$0xff]
      %v266 = vld [vmem:[#allocation2 + $0x8] sm:$0xff]
      %v267 = vpack.c.bf16 %v266, %v265
      %v269 = vunpack.c.l.b16 %v267
      %v270 = vunpack.c.h.b16 %v267
      %v271 = vpack.c.b16 %v269, %v269
      %v272 = vpack.c.b16 %v270, %v270
      %vm275 = vcmask 257024
      %276 = vst.msk [vmem:[#allocation9] sm:$0xf] %vm275, %v271
      %277 = vst.msk [vmem:[#allocation9 + $0x4] sm:$0xf] %vm275, %v272
    $region33: #{mlp_forward.1} parent=1 // pred_fallthru
      _
    // Predicated region
    $region34: #{mlp_forward.1} parent=1 // pred_check
      _
    $region35: #{mlp_forward.1} parent=1 // pred_check_branch
      %279 = sbr.rel (0) target = $region37
    $region36: #{mlp_forward.1} parent=1 // pred_region
      %s281 = ssub.s32 128, 128
      %282 = vsyncadd [#allocation5], %s281
      %s283 = sshll.u32 [#allocation9], 4
      %s284 = int_to_ptr.vmem [resolvable:$true] %s283
      %289 = dma.vmem_to_hbm [thread:$0]  %s284, 128, %s3, [#allocation5], 64, 64, 4
    $region37: #{mlp_forward.1} parent=1 // pred_fallthru
      _
    // Predicated region
    $region38: #{mlp_forward.1} parent=1 // pred_check
      _
    $region39: #{mlp_forward.1} parent=1 // pred_check_branch
      %291 = sbr.rel (0) target = $region41
    $region40: #{mlp_forward.1} parent=1 // pred_region
      %292 = dma.done [#allocation5], 128
    $region41: #{mlp_forward.1} parent=1 // pred_fallthru
      _
    %293 = vsyncpa [#allocation4], 1
    %294 = vsyncpa [#allocation7], 1
    %295 = vsyncpa [#allocation5], 1

</llo_original>
